<compile_context>
chip_gen: v7x
topology: tpu7x:2x2x1
jax: 0.10.0
libtpu: 0.0.40
codegen_flags: <defaults>
</compile_context>

<pallas_src>
import functools

import jax
import jax.numpy as jnp
from jax.experimental import pallas as pl
from jax.experimental.pallas import tpu as pltpu


def policy_kernel(state_ref, w1_ref, b1_ref, w23_ref, b23_ref, out_ref, *,
                  action_dim):
    x = state_ref[...]                                           # (TB, obs_dim)

    # Shared layer + ReLU (matmul on MXU, elementwise on VPU).
    h = jnp.dot(x, w1_ref[...], preferred_element_type=jnp.float32) + b1_ref[...]
    h = jnp.maximum(h, 0.0)                                      # (TB, hidden)

    # Fused action+value head: one lane-dense MXU matmul.
    # z[:, :A] = action logits, z[:, A] = state value, z[:, A+1:] = padding.
    z = jnp.dot(h, w23_ref[...], preferred_element_type=jnp.float32) + b23_ref[...]

    col = jax.lax.broadcasted_iota(jnp.int32, z.shape, 1)        # lane index
    is_logit = col < action_dim

    # Numerically-stable softmax over the action lanes only; padded lanes are
    # pushed to a huge negative so exp() underflows to 0 and cannot corrupt
    # the max/sum normalization.
    logits = jnp.where(is_logit, z, jnp.float32(-1e30))
    m = jnp.max(logits, axis=-1, keepdims=True)
    e = jnp.exp(logits - m)
    probs = e / jnp.sum(e, axis=-1, keepdims=True)               # exact divide

    # Lane-dense combined output slab:
    #   lanes [0:A) -> probs, lane A -> state value, remaining lanes -> 0.
    out_ref[...] = jnp.where(is_logit, probs,
                             jnp.where(col == action_dim, z, 0.0))


def policy_forward(state, params):
    """state: (B, obs_dim) f32.  Returns (action_prob (B, A), state_value (B, 1))."""
    w1, b1, w2, b2, w3, b3 = params
    B, obs_dim = state.shape
    hidden = w1.shape[1]
    A = w2.shape[1]

    # Lane-dense fused-head width (>= A + 1, multiple of 128).
    OUT_W = 128 * pl.cdiv(A + 1, 128)
    w23 = jnp.zeros((hidden, OUT_W), jnp.float32)
    w23 = w23.at[:, :A].set(w2).at[:, A:A + 1].set(w3)
    b23 = jnp.zeros((1, OUT_W), jnp.float32)
    b23 = b23.at[:, :A].set(b2).at[:, A:A + 1].set(b3)

    # Batch tiling: TB a multiple of 8, capped for v7x's 64 MiB VMEM.
    TB = min(512, 8 * pl.cdiv(B, 8))
    B_pad = TB * pl.cdiv(B, TB)
    if B_pad != B:
        state = jnp.pad(state, ((0, B_pad - B), (0, 0)))

    kernel = functools.partial(policy_kernel, action_dim=A)

    out = pl.pallas_call(
        kernel,
        out_shape=jax.ShapeDtypeStruct((B_pad, OUT_W), jnp.float32),
        grid=(B_pad // TB,),
        in_specs=[
            pl.BlockSpec((TB, obs_dim), lambda i: (i, 0)),       # state tile
            pl.BlockSpec((obs_dim, hidden), lambda i: (0, 0)),   # w1 (resident)
            pl.BlockSpec((1, hidden), lambda i: (0, 0)),         # b1
            pl.BlockSpec((hidden, OUT_W), lambda i: (0, 0)),     # fused w2|w3
            pl.BlockSpec((1, OUT_W), lambda i: (0, 0)),          # fused b2|b3
        ],
        out_specs=pl.BlockSpec((TB, OUT_W), lambda i: (i, 0)),
        compiler_params=pltpu.CompilerParams(
            dimension_semantics=("parallel",)),
    )(state, w1, b1, w23, b23)

    action_prob = out[:B, :A]
    state_value = out[:B, A:A + 1]
    return action_prob, state_value


def init_params(key, obs_dim, hidden, action_dim):
    """Deterministic init mimicking nn.Linear (U[-1/sqrt(fan_in), 1/sqrt(fan_in)]).

    Weights are stored already transposed to (in, out) for the kernel.
    """
    ks = jax.random.split(key, 6)

    def u(k, shape, fan_in):
        bound = 1.0 / jnp.sqrt(fan_in)
        return jax.random.uniform(k, shape, jnp.float32, -bound, bound)

    w1 = u(ks[0], (obs_dim, hidden), obs_dim)       # shared_layer.weight^T
    b1 = u(ks[1], (1, hidden), obs_dim)             # shared_layer.bias
    w2 = u(ks[2], (hidden, action_dim), hidden)     # action_layer.weight^T
    b2 = u(ks[3], (1, action_dim), hidden)          # action_layer.bias
    w3 = u(ks[4], (hidden, 1), hidden)              # value_layer.weight^T
    b3 = u(ks[5], (1, 1), hidden)                   # value_layer.bias
    return (w1, b1, w2, b2, w3, b3)


if __name__ == "__main__":
    key = jax.random.PRNGKey(0)
    obs_dim, hidden, action_dim = 4, 128, 2   # e.g. CartPole-v1 sizes
    batch = 8                                 # amortize launch cost by batching env steps

    k_state, k_params = jax.random.split(key)
    state = jax.random.normal(k_state, (batch, obs_dim), dtype=jnp.float32)
    params = init_params(k_params, obs_dim, hidden, action_dim)

    probs, value = jax.block_until_ready(policy_forward(state, params))

    # Pure-JAX reference check.
    w1, b1, w2, b2, w3, b3 = params
    h_ref = jnp.maximum(state @ w1 + b1, 0.0)
    probs_ref = jax.nn.softmax(h_ref @ w2 + b2, axis=-1)
    value_ref = h_ref @ w3 + b3

    assert probs.shape == (batch, action_dim) and value.shape == (batch, 1)
    assert jnp.allclose(probs, probs_ref, atol=1e-5)
    assert jnp.allclose(value, value_ref, atol=1e-5)
    assert jnp.allclose(jnp.sum(probs, axis=-1), 1.0, atol=1e-5)

    # TODO(synk): select_action sampling and calculate_loss (returns/advantage
    # bookkeeping) are host-side training-loop logic, not part of forward().

    print("KERNEL_OK")
</pallas_src>

<mosaic_0001>
module attributes {stable_mosaic.version = 11 : i64} {
  func.func @policy_kernel(%arg0: i32, %arg1: memref<8x4xf32, #tpu.memory_space<vmem>>, %arg2: memref<4x128xf32, #tpu.memory_space<vmem>>, %arg3: memref<1x128xf32, #tpu.memory_space<vmem>>, %arg4: memref<128x128xf32, #tpu.memory_space<vmem>>, %arg5: memref<1x128xf32, #tpu.memory_space<vmem>>, %arg6: memref<8x128xf32, #tpu.memory_space<vmem>>) attributes {dimension_semantics = [#tpu.dimension_semantics<parallel>], iteration_bounds = array<i64: 1>, scalar_prefetch = 0 : i64, scratch_operands = 0 : i64, tpu.core_type = #tpu.core_type<tc>, window_params = [{transform_indices = @transform_0, window_bounds = array<i64: 8, 4>}, {pipeline_mode = #tpu.pipeline_mode<synchronous>, transform_indices = @transform_1, window_bounds = array<i64: 4, 128>}, {pipeline_mode = #tpu.pipeline_mode<synchronous>, transform_indices = @transform_2, window_bounds = array<i64: 1, 128>}, {pipeline_mode = #tpu.pipeline_mode<synchronous>, transform_indices = @transform_3, window_bounds = array<i64: 128, 128>}, {pipeline_mode = #tpu.pipeline_mode<synchronous>, transform_indices = @transform_4, window_bounds = array<i64: 1, 128>}, {transform_indices = @transform_5, window_bounds = array<i64: 8, 128>}]} {
    %c0 = arith.constant 0 : index
    %c0_0 = arith.constant 0 : index
    %0 = vector.load %arg1[%c0, %c0_0] : memref<8x4xf32, #tpu.memory_space<vmem>>, vector<8x4xf32>
    %c0_1 = arith.constant 0 : index
    %c0_2 = arith.constant 0 : index
    %1 = vector.load %arg2[%c0_1, %c0_2] : memref<4x128xf32, #tpu.memory_space<vmem>>, vector<4x128xf32>
    %cst = arith.constant dense<0.000000e+00> : vector<8x128xf32>
    %2 = tpu.matmul %0, %1, %cst {dimension_numbers = #tpu.dot_dimension_numbers<[1], [0], [0], [1], [0, 0, 1, 1], [], []>} : vector<8x4xf32>, vector<4x128xf32>, vector<8x128xf32> -> vector<8x128xf32>
    %c0_3 = arith.constant 0 : index
    %c0_4 = arith.constant 0 : index
    %3 = vector.load %arg3[%c0_3, %c0_4] : memref<1x128xf32, #tpu.memory_space<vmem>>, vector<1x128xf32>
    %4 = vector.broadcast %3 : vector<1x128xf32> to vector<8x128xf32>
    %5 = arith.addf %2, %4 : vector<8x128xf32>
    %cst_5 = arith.constant 0.000000e+00 : f32
    %6 = vector.broadcast %cst_5 : f32 to vector<8x128xf32>
    %7 = arith.maximumf %5, %6 : vector<8x128xf32>
    %c0_6 = arith.constant 0 : index
    %c0_7 = arith.constant 0 : index
    %8 = vector.load %arg4[%c0_6, %c0_7] : memref<128x128xf32, #tpu.memory_space<vmem>>, vector<128x128xf32>
    %cst_8 = arith.constant dense<0.000000e+00> : vector<8x128xf32>
    %9 = tpu.matmul %7, %8, %cst_8 {dimension_numbers = #tpu.dot_dimension_numbers<[1], [0], [0], [1], [0, 0, 1, 1], [], []>} : vector<8x128xf32>, vector<128x128xf32>, vector<8x128xf32> -> vector<8x128xf32>
    %c0_9 = arith.constant 0 : index
    %c0_10 = arith.constant 0 : index
    %10 = vector.load %arg5[%c0_9, %c0_10] : memref<1x128xf32, #tpu.memory_space<vmem>>, vector<1x128xf32>
    %11 = vector.broadcast %10 : vector<1x128xf32> to vector<8x128xf32>
    %12 = arith.addf %9, %11 : vector<8x128xf32>
    %13 = tpu.iota {dimensions = array<i32: 1>} : vector<8x128xi32>
    %c2_i32 = arith.constant 2 : i32
    %14 = vector.broadcast %c2_i32 : i32 to vector<8x128xi32>
    %15 = arith.cmpi slt, %13, %14 : vector<8x128xi32>
    %cst_11 = arith.constant -1.000000e+30 : f32
    %16 = vector.broadcast %cst_11 : f32 to vector<8x128xf32>
    %17 = arith.select %15, %12, %16 : vector<8x128xi1>, vector<8x128xf32>
    %cst_12 = arith.constant dense<0xFF800000> : vector<8xf32>
    %18 = vector.multi_reduction <maximumf>, %17, %cst_12 [1] : vector<8x128xf32> to vector<8xf32>
    %19 = vector.shape_cast %18 : vector<8xf32> to vector<8x1xf32>
    %20 = vector.broadcast %19 : vector<8x1xf32> to vector<8x128xf32>
    %21 = arith.subf %17, %20 : vector<8x128xf32>
    %22 = math.exp %21 : vector<8x128xf32>
    %cst_13 = arith.constant dense<0.000000e+00> : vector<8xf32>
    %23 = vector.multi_reduction <add>, %22, %cst_13 [1] : vector<8x128xf32> to vector<8xf32>
    %24 = vector.shape_cast %23 : vector<8xf32> to vector<8x1xf32>
    %25 = vector.broadcast %24 : vector<8x1xf32> to vector<8x128xf32>
    %26 = arith.divf %22, %25 : vector<8x128xf32>
    %c2_i32_14 = arith.constant 2 : i32
    %27 = vector.broadcast %c2_i32_14 : i32 to vector<8x128xi32>
    %28 = arith.cmpi eq, %13, %27 : vector<8x128xi32>
    %cst_15 = arith.constant 0.000000e+00 : f32
    %29 = vector.broadcast %cst_15 : f32 to vector<8x128xf32>
    %30 = arith.select %28, %12, %29 : vector<8x128xi1>, vector<8x128xf32>
    %31 = arith.select %15, %26, %30 : vector<8x128xi1>, vector<8x128xf32>
    %c0_16 = arith.constant 0 : index
    %c0_17 = arith.constant 0 : index
    %32 = vector.load %arg6[%c0_16, %c0_17] : memref<8x128xf32, #tpu.memory_space<vmem>>, vector<8x128xf32>
    tpu.vector_store %arg6[%c0_16, %c0_17], %31 {strides = array<i32>} : memref<8x128xf32, #tpu.memory_space<vmem>>, vector<8x128xf32>,
    return
  }
  func.func @transform_0(%arg0: i32) -> (i32, i32) {
    %c0_i32 = arith.constant 0 : i32
    %c0_i32_0 = arith.constant 0 : i32
    return %arg0, %c0_i32 : i32, i32
  }
  func.func @transform_1(%arg0: i32) -> (i32, i32) {
    %c0_i32 = arith.constant 0 : i32
    %c0_i32_0 = arith.constant 0 : i32
    %c0_i32_1 = arith.constant 0 : i32
    return %c0_i32, %c0_i32_0 : i32, i32
  }
  func.func @transform_2(%arg0: i32) -> (i32, i32) {
    %c0_i32 = arith.constant 0 : i32
    %c0_i32_0 = arith.constant 0 : i32
    %c0_i32_1 = arith.constant 0 : i32
    return %c0_i32, %c0_i32_0 : i32, i32
  }
  func.func @transform_3(%arg0: i32) -> (i32, i32) {
    %c0_i32 = arith.constant 0 : i32
    %c0_i32_0 = arith.constant 0 : i32
    %c0_i32_1 = arith.constant 0 : i32
    return %c0_i32, %c0_i32_0 : i32, i32
  }
  func.func @transform_4(%arg0: i32) -> (i32, i32) {
    %c0_i32 = arith.constant 0 : i32
    %c0_i32_0 = arith.constant 0 : i32
    %c0_i32_1 = arith.constant 0 : i32
    return %c0_i32, %c0_i32_0 : i32, i32
  }
  func.func @transform_5(%arg0: i32) -> (i32, i32) {
    %c0_i32 = arith.constant 0 : i32
    %c0_i32_0 = arith.constant 0 : i32
    return %arg0, %c0_i32 : i32, i32
  }
}

</mosaic_0001>

<llo_original>
// kernel: tpu_custom_call.1
$region0: #{tpu_custom_call.1}
  #allocation0 [shape = 'u32[]', space=smem, size = 0x4, offset = 0x4, fixed_abs, tag = 'smem constant byte address 0x4 - core index']
  #allocation1 [shape = 'u32[144,128]{1,0:T(1,128)}', space=vmem, size = 0x12000, scoped, tag = 'internal scratch']
  %s0 = inlined_call_operand.vmem [shape: f32[8,4], index: 0, kind: input, shape index: {}]
  %s1 = inlined_call_operand.vmem [shape: f32[4,128], index: 1, kind: input, shape index: {}]
  %s2 = inlined_call_operand.vmem [shape: f32[1,128], index: 2, kind: input, shape index: {}]
  %s3 = inlined_call_operand.hbm [shape: f32[128,128], index: 3, kind: input, shape index: {}]
  %s4 = inlined_call_operand.vmem [shape: f32[1,128], index: 4, kind: input, shape index: {}]
  %s5 = inlined_call_operand.hbm [shape: f32[8,128], index: 5, kind: output, shape index: {}]
  %s6 = sld [smem:[#allocation0]]
  $region34: #{tpu_custom_call.1} parent=0
    _
  %s8 = ssub.s32 1, %s6
  %s9 = scalar_select 0, %s8, %s6
  $region1: #{tpu_custom_call.1} parent=0
    #allocation2 [shape = 'u8[65536]{0}', space=vmem, size = 0x10000, scoped, tag = 'input window, operand 3, single buffered']
    #allocation3 [shape = 's32[1]{0}', space=sflag, size = 0x4, scoped, tag = 'scoped memory for tpu_custom_call.1']
    #allocation4 [shape = 's32[1]{0}', space=sflag, size = 0x4, scoped, tag = 'scoped memory for tpu_custom_call.1']
    #allocation5 [shape = 'u8[4096]{0}', space=vmem, size = 0x1000, scoped, tag = 'output window, operand 0, single buffered']
    %10 = vsyncpa [#allocation3], 0
    %11 = vsyncpa [#allocation4], 0
    // Predicated region
    $region2: #{tpu_custom_call.1} parent=1 // pred_check
      _
    $region3: #{tpu_custom_call.1} parent=1 // pred_check_branch
      %13 = sbr.rel (0) target = $region5
    $region4: #{tpu_custom_call.1} parent=1 // pred_region
      _
    $region5: #{tpu_custom_call.1} parent=1 // pred_fallthru
      _
    // Predicated region
    $region6: #{tpu_custom_call.1} parent=1 // pred_check
      _
    $region7: #{tpu_custom_call.1} parent=1 // pred_check_branch
      %15 = sbr.rel (0) target = $region9
    $region8: #{tpu_custom_call.1} parent=1 // pred_region
      _
    $region9: #{tpu_custom_call.1} parent=1 // pred_fallthru
      _
    // Predicated region
    $region10: #{tpu_custom_call.1} parent=1 // pred_check
      _
    $region11: #{tpu_custom_call.1} parent=1 // pred_check_branch
      %17 = sbr.rel (0) target = $region13
    $region12: #{tpu_custom_call.1} parent=1 // pred_region
      _
    $region13: #{tpu_custom_call.1} parent=1 // pred_fallthru
      _
    // Predicated region
    $region14: #{tpu_custom_call.1} parent=1 // pred_check
      _
    $region15: #{tpu_custom_call.1} parent=1 // pred_check_branch
      %19 = sbr.rel (0) target = $region17
    $region16: #{tpu_custom_call.1} parent=1 // pred_region
      %s21 = ssub.s32 2048, 2048
      %22 = vsyncadd [#allocation3], %s21
      %s23 = sshll.u32 [#allocation2], 4
      %s24 = int_to_ptr.vmem [resolvable:$true] %s23
      %29 = dma.hbm_to_vmem [thread:$0]  %s3, 2048, %s24, [#allocation3], 128, 128, 8
    $region17: #{tpu_custom_call.1} parent=1 // pred_fallthru
      _
    // Predicated region
    $region18: #{tpu_custom_call.1} parent=1 // pred_check
      _
    $region19: #{tpu_custom_call.1} parent=1 // pred_check_branch
      %31 = sbr.rel (0) target = $region21
    $region20: #{tpu_custom_call.1} parent=1 // pred_region
      _
    $region21: #{tpu_custom_call.1} parent=1 // pred_fallthru
      _
    // Predicated region
    $region22: #{tpu_custom_call.1} parent=1 // pred_check
      _
    $region23: #{tpu_custom_call.1} parent=1 // pred_check_branch
      %33 = sbr.rel (0) target = $region25
    $region24: #{tpu_custom_call.1} parent=1 // pred_region
      %34 = dma.done [#allocation3], 2048
    $region25: #{tpu_custom_call.1} parent=1 // pred_fallthru
      _
    %v35 = vld [vmem:[%s0] sm:$0xff]
    %v36 = vld [vmem:[%s1] sm:$0xf]
    %v37 = vld [vmem:[%s2] sm:$0x1]
    %v39 = vlaneseq
    %v40 = vshrl.u32 %v39, 7
    %v41 = vsub.s32 0, %v40
    %v42 = vrot.slane %v37, %v41
    %vm44 = vcmask 31744
    %v46 = vsel %vm44, %v35, 0
    %vm48 = vcmask 1043456
    %v50 = vsel %vm48, %v36, 0
    %52 = vmatprep.subr.mxu0 0.0
    %53 = vmatpush1.msra.mxu0 %v50
    %54 = vmatprep.subr.mxu0 0.0
    %55 = vmatpush1.msra.mxu0 0.0
    %56 = vmatprep.subr.mxu0 0.0
    %57 = vmatpush1.msra.mxu0 0.0
    %58 = vmatprep.subr.mxu0 0.0
    %59 = vmatpush1.msra.mxu0 0.0
    %60 = vmatprep.subr.mxu0 0.0
    %61 = vmatpush1.msra.mxu0 0.0
    %62 = vmatprep.subr.mxu0 0.0
    %63 = vmatpush1.msra.mxu0 0.0
    %64 = vmatprep.subr.mxu0 0.0
    %65 = vmatpush1.msra.mxu0 0.0
    %66 = vmatprep.subr.mxu0 0.0
    %67 = vmatpush1.msra.mxu0 0.0
    %68 = vmatprep.subr.mxu0 0.0
    %69 = vmatpush1.msra.mxu0 0.0
    %70 = vmatprep.subr.mxu0 0.0
    %71 = vmatpush1.msra.mxu0 0.0
    %72 = vmatprep.subr.mxu0 0.0
    %73 = vmatpush1.msra.mxu0 0.0
    %74 = vmatprep.subr.mxu0 0.0
    %75 = vmatpush1.msra.mxu0 0.0
    %76 = vmatprep.subr.mxu0 0.0
    %77 = vmatpush1.msra.mxu0 0.0
    %78 = vmatprep.subr.mxu0 0.0
    %79 = vmatpush1.msra.mxu0 0.0
    %80 = vmatprep.subr.mxu0 0.0
    %81 = vmatpush1.msra.mxu0 0.0
    %82 = vmatprep.subr.mxu0 0.0
    %83 = vmatpush1.msra.mxu0 0.0
    %84 = vmatprep.subr.mxu0 0.0
    %85 = vmatpush1.msra.mxu0 0.0
    %86 = vmatprep.subr.mxu0 0.0
    %87 = vmatpush1.msra.mxu0 0.0
    %88 = vmatprep.subr.mxu0 0.0
    %89 = vmatpush1.msra.mxu0 0.0
    %90 = vmatprep.subr.mxu0 0.0
    %91 = vmatpush1.msra.mxu0 0.0
    %92 = vmatprep.subr.mxu0 0.0
    %93 = vmatpush1.msra.mxu0 0.0
    %94 = vmatprep.subr.mxu0 0.0
    %95 = vmatpush1.msra.mxu0 0.0
    %96 = vmatprep.subr.mxu0 0.0
    %97 = vmatpush1.msra.mxu0 0.0
    %98 = vmatprep.subr.mxu0 0.0
    %99 = vmatpush1.msra.mxu0 0.0
    %100 = vmatprep.subr.mxu0 0.0
    %101 = vmatpush1.msra.mxu0 0.0
    %102 = vmatprep.subr.mxu0 0.0
    %103 = vmatpush1.msra.mxu0 0.0
    %104 = vmatprep.subr.mxu0 0.0
    %105 = vmatpush1.msra.mxu0 0.0
    %106 = vmatprep.subr.mxu0 0.0
    %107 = vmatpush1.msra.mxu0 0.0
    %108 = vmatprep.subr.mxu0 0.0
    %109 = vmatpush1.msra.mxu0 0.0
    %110 = vmatprep.subr.mxu0 0.0
    %111 = vmatpush1.msra.mxu0 0.0
    %112 = vmatprep.subr.mxu0 0.0
    %113 = vmatpush1.msra.mxu0 0.0
    %114 = vmatprep.subr.mxu0 0.0
    %115 = vmatpush1.msra.mxu0 0.0
    %116 = vmatprep.mubr.f32.mxu0 0.0
    %117 = vmatmul.mubr.f32.gmra.mrb[0].mxu0 %v46
    %v118 = vpop.f32.mrb[0].mxu0
    %v119 = vadd.f32 %v42, %v118
    %v120 = vpop.f32.mrb[0].mxu0
    %121 = vdwg.mxu0
    %v122 = vmax.f32 %v119, 0.0
    %v123 = vld [vmem:[#allocation2] sm:$0xff]
    %v124 = vld [vmem:[#allocation2 + $0x8] sm:$0xff]
    %v125 = vld [vmem:[#allocation2 + $0x10] sm:$0xff]
    %v126 = vld [vmem:[#allocation2 + $0x18] sm:$0xff]
    %v127 = vld [vmem:[#allocation2 + $0x20] sm:$0xff]
    %v128 = vld [vmem:[#allocation2 + $0x28] sm:$0xff]
    %v129 = vld [vmem:[#allocation2 + $0x30] sm:$0xff]
    %v130 = vld [vmem:[#allocation2 + $0x38] sm:$0xff]
    %v131 = vld [vmem:[#allocation2 + $0x40] sm:$0xff]
    %v132 = vld [vmem:[#allocation2 + $0x48] sm:$0xff]
    %v133 = vld [vmem:[#allocation2 + $0x50] sm:$0xff]
    %v134 = vld [vmem:[#allocation2 + $0x58] sm:$0xff]
    %v135 = vld [vmem:[#allocation2 + $0x60] sm:$0xff]
    %v136 = vld [vmem:[#allocation2 + $0x68] sm:$0xff]
    %v137 = vld [vmem:[#allocation2 + $0x70] sm:$0xff]
    %v138 = vld [vmem:[#allocation2 + $0x78] sm:$0xff]
    %v139 = vld [vmem:[%s4] sm:$0x1]
    %v141 = vlaneseq
    %v142 = vshrl.u32 %v141, 7
    %v143 = vsub.s32 0, %v142
    %v144 = vrot.slane %v139, %v143
    %146 = vmatprep.subr.mxu0 0.0
    %147 = vmatpush1.msra.mxu0 %v123
    %148 = vmatprep.subr.mxu0 0.0
    %149 = vmatpush1.msra.mxu0 %v124
    %150 = vmatprep.subr.mxu0 0.0
    %151 = vmatpush1.msra.mxu0 %v125
    %152 = vmatprep.subr.mxu0 0.0
    %153 = vmatpush1.msra.mxu0 %v126
    %154 = vmatprep.subr.mxu0 0.0
    %155 = vmatpush1.msra.mxu0 %v127
    %156 = vmatprep.subr.mxu0 0.0
    %157 = vmatpush1.msra.mxu0 %v128
    %158 = vmatprep.subr.mxu0 0.0
    %159 = vmatpush1.msra.mxu0 %v129
    %160 = vmatprep.subr.mxu0 0.0
    %161 = vmatpush1.msra.mxu0 %v130
    %162 = vmatprep.subr.mxu0 0.0
    %163 = vmatpush1.msra.mxu0 %v131
    %164 = vmatprep.subr.mxu0 0.0
    %165 = vmatpush1.msra.mxu0 %v132
    %166 = vmatprep.subr.mxu0 0.0
    %167 = vmatpush1.msra.mxu0 %v133
    %168 = vmatprep.subr.mxu0 0.0
    %169 = vmatpush1.msra.mxu0 %v134
    %170 = vmatprep.subr.mxu0 0.0
    %171 = vmatpush1.msra.mxu0 %v135
    %172 = vmatprep.subr.mxu0 0.0
    %173 = vmatpush1.msra.mxu0 %v136
    %174 = vmatprep.subr.mxu0 0.0
    %175 = vmatpush1.msra.mxu0 %v137
    %176 = vmatprep.subr.mxu0 0.0
    %177 = vmatpush1.msra.mxu0 %v138
    %178 = vmatprep.subr.mxu0 0.0
    %179 = vmatpush1.msra.mxu0 0.0
    %180 = vmatprep.subr.mxu0 0.0
    %181 = vmatpush1.msra.mxu0 0.0
    %182 = vmatprep.subr.mxu0 0.0
    %183 = vmatpush1.msra.mxu0 0.0
    %184 = vmatprep.subr.mxu0 0.0
    %185 = vmatpush1.msra.mxu0 0.0
    %186 = vmatprep.subr.mxu0 0.0
    %187 = vmatpush1.msra.mxu0 0.0
    %188 = vmatprep.subr.mxu0 0.0
    %189 = vmatpush1.msra.mxu0 0.0
    %190 = vmatprep.subr.mxu0 0.0
    %191 = vmatpush1.msra.mxu0 0.0
    %192 = vmatprep.subr.mxu0 0.0
    %193 = vmatpush1.msra.mxu0 0.0
    %194 = vmatprep.subr.mxu0 0.0
    %195 = vmatpush1.msra.mxu0 0.0
    %196 = vmatprep.subr.mxu0 0.0
    %197 = vmatpush1.msra.mxu0 0.0
    %198 = vmatprep.subr.mxu0 0.0
    %199 = vmatpush1.msra.mxu0 0.0
    %200 = vmatprep.subr.mxu0 0.0
    %201 = vmatpush1.msra.mxu0 0.0
    %202 = vmatprep.subr.mxu0 0.0
    %203 = vmatpush1.msra.mxu0 0.0
    %204 = vmatprep.subr.mxu0 0.0
    %205 = vmatpush1.msra.mxu0 0.0
    %206 = vmatprep.subr.mxu0 0.0
    %207 = vmatpush1.msra.mxu0 0.0
    %208 = vmatprep.subr.mxu0 0.0
    %209 = vmatpush1.msra.mxu0 0.0
    %210 = vmatprep.mubr.f32.mxu0 0.0
    %211 = vmatmul.mubr.f32.gmra.mrb[0].mxu0 %v122
    %v212 = vpop.f32.mrb[0].mxu0
    %v213 = vadd.f32 %v144, %v212
    %v214 = vpop.f32.mrb[0].mxu0
    %215 = vdwg.mxu0
    %v216 = vlaneseq
    %v217 = vand.u32 %v216, 127
    %vm218 = vcmp.lt.s32.totalorder %v217, 2
    %v219 = vsel %vm218, %v213, -1e+30
    %220 = vmax.xlane.f32.xlu0 %v219
    %v221 = vpop.xlane.xlu0 %220
    %v222 = vsub.f32 %v219, %v221
    %v223 = vmul.f32 %v222, 1.442695
    %v224 = vpow.pop %v223
    %225 = vadd.xlane.f32.xlu0 %v224
    %v226 = vpop.xlane.xlu0 %225
    %v227 = vrcp.pop %v226
    %v228 = vmul.f32 %v224, %v227
    %vm229 = vcmp.eq.s32.totalorder %v217, 2
    %v230 = vsel %vm229, %v213, 0.0
    %v231 = vsel %vm218, %v228, %v230
    %232 = vst [vmem:[#allocation5] sm:$0xff] %v231
    // Predicated region
    $region26: #{tpu_custom_call.1} parent=1 // pred_check
      _
    $region27: #{tpu_custom_call.1} parent=1 // pred_check_branch
      %234 = sbr.rel (0) target = $region29
    $region28: #{tpu_custom_call.1} parent=1 // pred_region
      %s236 = ssub.s32 128, 128
      %237 = vsyncadd [#allocation4], %s236
      %s239 = sshll.u32 [#allocation5], 4
      %s240 = int_to_ptr.vmem [resolvable:$true] %s239
      %242 = dma.vmem_to_hbm [thread:$0]  %s240, 128, %s5, [#allocation4]
    $region29: #{tpu_custom_call.1} parent=1 // pred_fallthru
      _
    // Predicated region
    $region30: #{tpu_custom_call.1} parent=1 // pred_check
      _
    $region31: #{tpu_custom_call.1} parent=1 // pred_check_branch
      %244 = sbr.rel (0) target = $region33
    $region32: #{tpu_custom_call.1} parent=1 // pred_region
      %245 = dma.done [#allocation4], 128
    $region33: #{tpu_custom_call.1} parent=1 // pred_fallthru
      _
    %246 = vsyncpa [#allocation3], 1
    %247 = vsyncpa [#allocation4], 1

</llo_original>
